<compile_context>
chip_gen: v5e
topology: v5e:2x2
jax: 0.10.0
libtpu: 0.0.40
codegen_flags: <defaults>
</compile_context>

<pallas_src>
import jax
import jax.numpy as jnp
from jax.experimental import pallas as pl
from jax.experimental.pallas import tpu as pltpu


def _round_up(x, m):
    return ((x + m - 1) // m) * m


def _highway_kernel(x_ref, w_ref, b_ref, o_ref):
    """Process one (TB, E_pad) batch tile.

    w_ref: (E_pad, 2*E_pad) bf16 = [ Wp^T | Wg^T ]   (lane-padded, zero-filled)
    b_ref: (1,    2*E_pad) f32  = [ bp   | bg, -1e30 on padded gate lanes ]
    """
    e_pad = x_ref.shape[1]

    x = x_ref[...]                                    # load once, reuse
    # Single fused bf16 MXU pass for both branches, f32 accumulation.
    y = jnp.dot(x.astype(jnp.bfloat16), w_ref[...],
                preferred_element_type=jnp.float32)
    y = y + b_ref[...]

    proj = jnp.maximum(y[:, :e_pad], 0.0)             # relu branch
    logits = y[:, e_pad:]                             # gate branch (mask baked into bias)

    m = jnp.max(logits, axis=1, keepdims=True)
    p = jnp.exp(logits - m)
    denom = jnp.sum(p, axis=1, keepdims=True)
    gate = p * (1.0 / denom)                          # exact tiny (TB,1) divide

    o_ref[...] = (x + gate * (proj - x)).astype(o_ref.dtype)


def highway_forward(x, w_proj, b_proj, w_gate, b_gate):
    """x: (B, E) float32; w_*: (E, E) in PyTorch nn.Linear layout; b_*: (E,)."""
    B, E = x.shape
    E_pad = _round_up(E, 128)

    # --- per-device VMEM budget -> batch tile size ---------------------------
    try:
        vmem_cap = int(pltpu.get_tpu_info().vmem_capacity_bytes)
    except Exception:
        vmem_cap = 64 * 1024 * 1024                   # v7x-safe fallback
    budget = int(vmem_cap * 0.8)

    w_bytes = 2 * (E_pad * 2 * E_pad) * 2             # bf16 weights (x2: dbl-buffer safety)
    b_bytes = 2 * (2 * E_pad) * 4
    avail = max(budget - w_bytes - b_bytes, 1 << 20)

    # Double-buffered f32 x/out tiles: 2 bufs * 2 arrays * TB * E_pad * 4 B.
    tb_cap = avail // (16 * E_pad)
    TB = max(8, min(2048, (tb_cap // 8) * 8))
    TB = min(TB, _round_up(B, 8))

    # v7x has 2 TensorCores: give the "parallel" batch grid >= 2 steps if possible.
    if B >= 16 and -(-B // TB) < 2:
        TB = _round_up(-(-B // 2), 8)

    grid = (pl.cdiv(B, TB),)                          # ragged last block, no batch pad

    # --- fused / padded weights & biases (single MXU pass) -------------------
    w_cat = jnp.zeros((E_pad, 2 * E_pad), jnp.bfloat16)
    w_cat = w_cat.at[:E, :E].set(w_proj.T.astype(jnp.bfloat16))
    w_cat = w_cat.at[:E, E_pad:E_pad + E].set(w_gate.T.astype(jnp.bfloat16))

    b_cat = jnp.zeros((1, 2 * E_pad), jnp.float32)
    b_cat = b_cat.at[0, :E].set(b_proj.astype(jnp.float32))
    b_cat = b_cat.at[0, E_pad:E_pad + E].set(b_gate.astype(jnp.float32))
    if E_pad > E:
        # Padded gate weight columns are zero, so padded logits == bias:
        # a large finite negative keeps them out of the softmax (no inf-inf).
        b_cat = b_cat.at[0, E_pad + E:].set(-1e30)

    # Only the embed dim needs padding (128-lane alignment); skipped when aligned.
    x_in = x if E_pad == E else jnp.pad(x, ((0, 0), (0, E_pad - E)))

    est = w_bytes + b_bytes + 4 * TB * E_pad * 4
    vmem_limit = min(int(vmem_cap * 0.85), max(32 * 1024 * 1024, int(est * 1.25)))

    out = pl.pallas_call(
        _highway_kernel,
        out_shape=jax.ShapeDtypeStruct((B, E_pad), x.dtype),
        grid=grid,
        in_specs=[
            pl.BlockSpec((TB, E_pad), lambda i: (i, 0)),          # x tile (pipelined)
            pl.BlockSpec((E_pad, 2 * E_pad), lambda i: (0, 0)),   # fused weights (resident)
            pl.BlockSpec((1, 2 * E_pad), lambda i: (0, 0)),       # fused biases  (resident)
        ],
        out_specs=pl.BlockSpec((TB, E_pad), lambda i: (i, 0)),
        compiler_params=pltpu.CompilerParams(
            dimension_semantics=("parallel",),
            vmem_limit_bytes=vmem_limit,
        ),
    )(x_in, w_cat, b_cat)

    return out if E_pad == E else out[:, :E]


def highway_reference(x, w_proj, b_proj, w_gate, b_gate):
    proj = jax.nn.relu(x @ w_proj.T + b_proj)
    gate = jax.nn.softmax(x @ w_gate.T + b_gate, axis=1)
    return proj * gate + (1.0 - gate) * x


if __name__ == "__main__":
    batch_size = 8
    embed_size = 32

    key = jax.random.PRNGKey(0)
    kx, kwp, kbp, kwg, kbg = jax.random.split(key, 5)

    # nn.Linear shapes: weight (out, in), bias (out,)
    x = jax.random.normal(kx, (batch_size, embed_size), dtype=jnp.float32)
    w_proj = jax.random.normal(kwp, (embed_size, embed_size), dtype=jnp.float32) * 0.1
    b_proj = jax.random.normal(kbp, (embed_size,), dtype=jnp.float32) * 0.1
    w_gate = jax.random.normal(kwg, (embed_size, embed_size), dtype=jnp.float32) * 0.1
    b_gate = jax.random.normal(kbg, (embed_size,), dtype=jnp.float32) * 0.1

    out = highway_forward(x, w_proj, b_proj, w_gate, b_gate)
    out = jax.block_until_ready(out)

    ref = highway_reference(x, w_proj, b_proj, w_gate, b_gate)
    assert out.shape == (batch_size, embed_size)
    # Tolerance accounts for the bf16 MXU path (inputs/weights cast to bf16,
    # f32 accumulation); softmax divide itself is exact.
    assert jnp.allclose(out, ref, atol=2e-2, rtol=2e-2), "mismatch vs reference"

    print("KERNEL_OK")
</pallas_src>

<mosaic_0001>
module attributes {stable_mosaic.version = 11 : i64} {
  func.func @_highway_kernel(%arg0: i32, %arg1: memref<8x128xf32, #tpu.memory_space<vmem>>, %arg2: memref<128x256xbf16, #tpu.memory_space<vmem>>, %arg3: memref<1x256xf32, #tpu.memory_space<vmem>>, %arg4: memref<8x128xf32, #tpu.memory_space<vmem>>) attributes {dimension_semantics = [#tpu.dimension_semantics<parallel>], iteration_bounds = array<i64: 1>, scalar_prefetch = 0 : i64, scratch_operands = 0 : i64, tpu.core_type = #tpu.core_type<tc>, window_params = [{transform_indices = @transform_0, window_bounds = array<i64: 8, 128>}, {pipeline_mode = #tpu.pipeline_mode<synchronous>, transform_indices = @transform_1, window_bounds = array<i64: 128, 256>}, {pipeline_mode = #tpu.pipeline_mode<synchronous>, transform_indices = @transform_2, window_bounds = array<i64: 1, 256>}, {transform_indices = @transform_3, window_bounds = array<i64: 8, 128>}]} {
    %c0 = arith.constant 0 : index
    %c0_0 = arith.constant 0 : index
    %0 = vector.load %arg1[%c0, %c0_0] : memref<8x128xf32, #tpu.memory_space<vmem>>, vector<8x128xf32>
    %1 = arith.truncf %0 : vector<8x128xf32> to vector<8x128xbf16>
    %c0_1 = arith.constant 0 : index
    %c0_2 = arith.constant 0 : index
    %2 = vector.load %arg2[%c0_1, %c0_2] : memref<128x256xbf16, #tpu.memory_space<vmem>>, vector<128x256xbf16>
    %cst = arith.constant dense<0.000000e+00> : vector<8x256xf32>
    %3 = tpu.matmul %1, %2, %cst {dimension_numbers = #tpu.dot_dimension_numbers<[1], [0], [0], [1], [0, 0, 1, 1], [], []>} : vector<8x128xbf16>, vector<128x256xbf16>, vector<8x256xf32> -> vector<8x256xf32>
    %c0_3 = arith.constant 0 : index
    %c0_4 = arith.constant 0 : index
    %4 = vector.load %arg3[%c0_3, %c0_4] : memref<1x256xf32, #tpu.memory_space<vmem>>, vector<1x256xf32>
    %5 = vector.broadcast %4 : vector<1x256xf32> to vector<8x256xf32>
    %6 = arith.addf %3, %5 : vector<8x256xf32>
    %7 = vector.extract_strided_slice %6 {offsets = [0, 0], sizes = [8, 128], strides = [1, 1]} : vector<8x256xf32> to vector<8x128xf32>
    %cst_5 = arith.constant 0.000000e+00 : f32
    %8 = vector.broadcast %cst_5 : f32 to vector<8x128xf32>
    %9 = arith.maximumf %7, %8 : vector<8x128xf32>
    %10 = vector.extract_strided_slice %6 {offsets = [0, 128], sizes = [8, 128], strides = [1, 1]} : vector<8x256xf32> to vector<8x128xf32>
    %cst_6 = arith.constant dense<0xFF800000> : vector<8xf32>
    %11 = vector.multi_reduction <maximumf>, %10, %cst_6 [1] : vector<8x128xf32> to vector<8xf32>
    %12 = vector.shape_cast %11 : vector<8xf32> to vector<8x1xf32>
    %13 = vector.broadcast %12 : vector<8x1xf32> to vector<8x128xf32>
    %14 = arith.subf %10, %13 : vector<8x128xf32>
    %15 = math.exp %14 : vector<8x128xf32>
    %cst_7 = arith.constant dense<0.000000e+00> : vector<8xf32>
    %16 = vector.multi_reduction <add>, %15, %cst_7 [1] : vector<8x128xf32> to vector<8xf32>
    %17 = vector.shape_cast %16 : vector<8xf32> to vector<8x1xf32>
    %cst_8 = arith.constant 1.000000e+00 : f32
    %18 = vector.broadcast %cst_8 : f32 to vector<8x1xf32>
    %19 = arith.divf %18, %17 : vector<8x1xf32>
    %20 = vector.broadcast %19 : vector<8x1xf32> to vector<8x128xf32>
    %21 = arith.mulf %15, %20 : vector<8x128xf32>
    %22 = arith.subf %9, %0 : vector<8x128xf32>
    %23 = arith.mulf %21, %22 : vector<8x128xf32>
    %24 = arith.addf %0, %23 : vector<8x128xf32>
    %c0_9 = arith.constant 0 : index
    %c0_10 = arith.constant 0 : index
    %25 = vector.load %arg4[%c0_9, %c0_10] : memref<8x128xf32, #tpu.memory_space<vmem>>, vector<8x128xf32>
    tpu.vector_store %arg4[%c0_9, %c0_10], %24 {strides = array<i32>} : memref<8x128xf32, #tpu.memory_space<vmem>>, vector<8x128xf32>,
    return
  }
  func.func @transform_0(%arg0: i32) -> (i32, i32) {
    %c0_i32 = arith.constant 0 : i32
    %c0_i32_0 = arith.constant 0 : i32
    return %arg0, %c0_i32 : i32, i32
  }
  func.func @transform_1(%arg0: i32) -> (i32, i32) {
    %c0_i32 = arith.constant 0 : i32
    %c0_i32_0 = arith.constant 0 : i32
    %c0_i32_1 = arith.constant 0 : i32
    return %c0_i32, %c0_i32_0 : i32, i32
  }
  func.func @transform_2(%arg0: i32) -> (i32, i32) {
    %c0_i32 = arith.constant 0 : i32
    %c0_i32_0 = arith.constant 0 : i32
    %c0_i32_1 = arith.constant 0 : i32
    return %c0_i32, %c0_i32_0 : i32, i32
  }
  func.func @transform_3(%arg0: i32) -> (i32, i32) {
    %c0_i32 = arith.constant 0 : i32
    %c0_i32_0 = arith.constant 0 : i32
    return %arg0, %c0_i32 : i32, i32
  }
}

</mosaic_0001>

<llo_original>
// kernel: tpu_custom_call.1
$region0: #{tpu_custom_call.1}
  #allocation0 [shape = 'u32[]', space=smem, size = 0x4, offset = 0x4, fixed_abs, tag = 'smem constant byte address 0x4 - core index']
  #allocation1 [shape = 'u32[72,128]{1,0:T(1,128)}', space=vmem, size = 0x9000, scoped, tag = 'internal scratch']
  %s0 = inlined_call_operand.hbm [shape: f32[8,128], index: 0, kind: input, shape index: {}]
  %s1 = inlined_call_operand.hbm [shape: bf16[128,256], index: 1, kind: input, shape index: {}]
  %s2 = inlined_call_operand.hbm [shape: f32[1,256], index: 2, kind: input, shape index: {}]
  %s3 = inlined_call_operand.hbm [shape: f32[8,128], index: 3, kind: output, shape index: {}]
  %s4 = sld [smem:[#allocation0]]
  $region34: #{tpu_custom_call.1} parent=0
    _
  %s6 = ssub.s32 1, %s4
  %s7 = scalar_select 0, %s6, %s4
  $region1: #{tpu_custom_call.1} parent=0
    #allocation2 [shape = 'u8[4096]{0}', space=vmem, size = 0x1000, scoped, tag = 'input window, operand 0, single buffered']
    #allocation3 [shape = 's32[1]{0}', space=sflag, size = 0x4, scoped, tag = 'scoped memory for tpu_custom_call.1']
    #allocation4 [shape = 's32[1]{0}', space=sflag, size = 0x4, scoped, tag = 'scoped memory for tpu_custom_call.1']
    #allocation5 [shape = 'u8[65536]{0}', space=vmem, size = 0x10000, scoped, tag = 'input window, operand 1, single buffered']
    #allocation6 [shape = 's32[1]{0}', space=sflag, size = 0x4, scoped, tag = 'scoped memory for tpu_custom_call.1']
    #allocation7 [shape = 'u8[1024]{0}', space=vmem, size = 0x400, scoped, tag = 'input window, operand 2, single buffered']
    #allocation8 [shape = 'u8[4096]{0}', space=vmem, size = 0x1000, scoped, tag = 'output window, operand 0, single buffered']
    %8 = vsyncpa [#allocation3], 0
    %9 = vsyncpa [#allocation6], 0
    %10 = vsyncpa [#allocation4], 0
    // Predicated region
    $region2: #{tpu_custom_call.1} parent=1 // pred_check
      _
    $region3: #{tpu_custom_call.1} parent=1 // pred_check_branch
      %12 = sbr.rel (0) target = $region5
    $region4: #{tpu_custom_call.1} parent=1 // pred_region
      %14 = vsyncadd [#allocation3], 0
      %s16 = sshll.u32 %s0, 4
      %s17 = int_to_ptr.hbm [resolvable:$true] %s16
      %s18 = sshll.u32 [#allocation2], 4
      %s19 = int_to_ptr.vmem [resolvable:$true] %s18
      %21 = dma.hbm_to_vmem [thread:$0]  %s17, 128, %s19, [#allocation3]
    $region5: #{tpu_custom_call.1} parent=1 // pred_fallthru
      _
    // Predicated region
    $region6: #{tpu_custom_call.1} parent=1 // pred_check
      _
    $region7: #{tpu_custom_call.1} parent=1 // pred_check_branch
      %23 = sbr.rel (0) target = $region9
    $region8: #{tpu_custom_call.1} parent=1 // pred_region
      %25 = vsyncadd [#allocation6], 0
      %s26 = sshll.u32 %s1, 4
      %s27 = int_to_ptr.hbm [resolvable:$true] %s26
      %s28 = sshll.u32 [#allocation5], 4
      %s29 = int_to_ptr.vmem [resolvable:$true] %s28
      %34 = dma.hbm_to_vmem [thread:$0]  %s27, 2048, %s29, [#allocation6], 128, 128, 8
    $region9: #{tpu_custom_call.1} parent=1 // pred_fallthru
      _
    // Predicated region
    $region10: #{tpu_custom_call.1} parent=1 // pred_check
      _
    $region11: #{tpu_custom_call.1} parent=1 // pred_check_branch
      %36 = sbr.rel (0) target = $region13
    $region12: #{tpu_custom_call.1} parent=1 // pred_region
      %38 = vsyncadd [#allocation6], 0
      %s40 = sshll.u32 %s2, 4
      %s41 = int_to_ptr.hbm [resolvable:$true] %s40
      %s42 = sshll.u32 [#allocation7], 4
      %s43 = int_to_ptr.vmem [resolvable:$true] %s42
      %45 = dma.hbm_to_vmem [thread:$0]  %s41, 32, %s43, [#allocation6]
    $region13: #{tpu_custom_call.1} parent=1 // pred_fallthru
      _
    // Predicated region
    $region14: #{tpu_custom_call.1} parent=1 // pred_check
      _
    $region15: #{tpu_custom_call.1} parent=1 // pred_check_branch
      %47 = sbr.rel (0) target = $region17
    $region16: #{tpu_custom_call.1} parent=1 // pred_region
      %49 = dma.done [#allocation3], 128
    $region17: #{tpu_custom_call.1} parent=1 // pred_fallthru
      _
    // Predicated region
    $region18: #{tpu_custom_call.1} parent=1 // pred_check
      _
    $region19: #{tpu_custom_call.1} parent=1 // pred_check_branch
      %51 = sbr.rel (0) target = $region21
    $region20: #{tpu_custom_call.1} parent=1 // pred_region
      %53 = dma.done [#allocation6], 2048
    $region21: #{tpu_custom_call.1} parent=1 // pred_fallthru
      _
    // Predicated region
    $region22: #{tpu_custom_call.1} parent=1 // pred_check
      _
    $region23: #{tpu_custom_call.1} parent=1 // pred_check_branch
      %55 = sbr.rel (0) target = $region25
    $region24: #{tpu_custom_call.1} parent=1 // pred_region
      %57 = dma.done [#allocation6], 32
    $region25: #{tpu_custom_call.1} parent=1 // pred_fallthru
      _
    %v58 = vld [vmem:[#allocation2] sm:$0xff]
    %v59 = vpack.c.bf16 %v58, %v58
    %v60 = vld [vmem:[#allocation5] sm:$0xff]
    %v61 = vld [vmem:[#allocation5 + $0x8] sm:$0xff]
    %v62 = vld [vmem:[#allocation5 + $0x10] sm:$0xff]
    %v63 = vld [vmem:[#allocation5 + $0x18] sm:$0xff]
    %v64 = vld [vmem:[#allocation5 + $0x20] sm:$0xff]
    %v65 = vld [vmem:[#allocation5 + $0x28] sm:$0xff]
    %v66 = vld [vmem:[#allocation5 + $0x30] sm:$0xff]
    %v67 = vld [vmem:[#allocation5 + $0x38] sm:$0xff]
    %v68 = vld [vmem:[#allocation5 + $0x40] sm:$0xff]
    %v69 = vld [vmem:[#allocation5 + $0x48] sm:$0xff]
    %v70 = vld [vmem:[#allocation5 + $0x50] sm:$0xff]
    %v71 = vld [vmem:[#allocation5 + $0x58] sm:$0xff]
    %v72 = vld [vmem:[#allocation5 + $0x60] sm:$0xff]
    %v73 = vld [vmem:[#allocation5 + $0x68] sm:$0xff]
    %v74 = vld [vmem:[#allocation5 + $0x70] sm:$0xff]
    %v75 = vld [vmem:[#allocation5 + $0x78] sm:$0xff]
    %v76 = vld [vmem:[#allocation7] sm:$0x3]
    %v78 = vperm.slane %v76, 0
    %v79 = vperm.slane %v76, 1
    %v98 = vunpack.c.l.b16 %v60
    %v99 = vunpack.c.h.b16 %v60
    %v100 = vunpack.c.l.b16 %v61
    %v101 = vunpack.c.h.b16 %v61
    %v102 = vunpack.c.l.b16 %v62
    %v103 = vunpack.c.h.b16 %v62
    %v104 = vunpack.c.l.b16 %v63
    %v105 = vunpack.c.h.b16 %v63
    %v106 = vunpack.c.l.b16 %v64
    %v107 = vunpack.c.h.b16 %v64
    %v108 = vunpack.c.l.b16 %v65
    %v109 = vunpack.c.h.b16 %v65
    %v110 = vunpack.c.l.b16 %v66
    %v111 = vunpack.c.h.b16 %v66
    %v112 = vunpack.c.l.b16 %v67
    %v113 = vunpack.c.h.b16 %v67
    %v114 = vunpack.c.l.b16 %v68
    %v115 = vunpack.c.h.b16 %v68
    %v116 = vunpack.c.l.b16 %v69
    %v117 = vunpack.c.h.b16 %v69
    %v118 = vunpack.c.l.b16 %v70
    %v119 = vunpack.c.h.b16 %v70
    %v120 = vunpack.c.l.b16 %v71
    %v121 = vunpack.c.h.b16 %v71
    %v122 = vunpack.c.l.b16 %v72
    %v123 = vunpack.c.h.b16 %v72
    %v124 = vunpack.c.l.b16 %v73
    %v125 = vunpack.c.h.b16 %v73
    %v126 = vunpack.c.l.b16 %v74
    %v127 = vunpack.c.h.b16 %v74
    %v128 = vunpack.c.l.b16 %v75
    %v129 = vunpack.c.h.b16 %v75
    %v130 = vpack.c.b16 %v100, %v98
    %v131 = vpack.c.b16 %v101, %v99
    %v132 = vpack.c.b16 %v104, %v102
    %v133 = vpack.c.b16 %v105, %v103
    %v134 = vpack.c.b16 %v108, %v106
    %v135 = vpack.c.b16 %v109, %v107
    %v136 = vpack.c.b16 %v112, %v110
    %v137 = vpack.c.b16 %v113, %v111
    %v138 = vpack.c.b16 %v116, %v114
    %v139 = vpack.c.b16 %v117, %v115
    %v140 = vpack.c.b16 %v120, %v118
    %v141 = vpack.c.b16 %v121, %v119
    %v142 = vpack.c.b16 %v124, %v122
    %v143 = vpack.c.b16 %v125, %v123
    %v144 = vpack.c.b16 %v128, %v126
    %v145 = vpack.c.b16 %v129, %v127
    %162 = vmatpush.bf16.msra.mxu0 %v144
    %163 = vmatpush.bf16.msra.mxu0 %v142
    %164 = vmatpush.bf16.msra.mxu0 %v140
    %165 = vmatpush.bf16.msra.mxu0 %v138
    %166 = vmatpush.bf16.msra.mxu0 %v136
    %167 = vmatpush.bf16.msra.mxu0 %v134
    %168 = vmatpush.bf16.msra.mxu0 %v132
    %169 = vmatpush.bf16.msra.mxu0 %v130
    %170 = vmatmul.bf16.gmra.mxu0 %v59
    %v171 = vpop.f32.mrf.mxu0
    %v172 = vadd.f32 %v78, %v171
    %v173 = vpop.f32.mrf.mxu0
    %174 = vdwg.mxu0
    %175 = vmatpush.bf16.msra.mxu0 %v145
    %176 = vmatpush.bf16.msra.mxu0 %v143
    %177 = vmatpush.bf16.msra.mxu0 %v141
    %178 = vmatpush.bf16.msra.mxu0 %v139
    %179 = vmatpush.bf16.msra.mxu0 %v137
    %180 = vmatpush.bf16.msra.mxu0 %v135
    %181 = vmatpush.bf16.msra.mxu0 %v133
    %182 = vmatpush.bf16.msra.mxu0 %v131
    %183 = vmatmul.bf16.gmra.mxu0 %v59
    %v184 = vpop.f32.mrf.mxu0
    %v185 = vadd.f32 %v79, %v184
    %v186 = vpop.f32.mrf.mxu0
    %187 = vdwg.mxu0
    %v188 = vmax.f32 %v172, 0.0
    %189 = vmax.xlane.f32.xlu0 %v185
    %v190 = vpop.xlane.xlu0 %189
    %v191 = vsub.f32 %v185, %v190
    %v192 = vmul.f32 %v191, 1.442695
    %v193 = vpow.pop %v192
    %194 = vadd.xlane.f32.xlu0 %v193
    %v195 = vpop.xlane.xlu0 %194
    %v196 = vrcp.pop %v195
    %v197 = vmul.f32 %v195, %v196
    %v198 = vsub.f32 1.0, %v197
    %v199 = vmul.f32 %v196, %v198
    %v200 = vadd.f32 %v196, %v199
    %vm201 = vweird.f32 %v195
    %vm202 = vweird.f32 %v196
    %vm203 = vmor %vm201, %vm202
    %v204 = vsel %vm203, %v196, %v200
    %v205 = vand.u32 2147483647, %v195
    %vm206 = vcmp.eq.f32.partialorder %v205, 8.507059e+37
    %v207 = vand.u32 %v195, 2147483648
    %v208 = vor.u32 1.1754944e-38, %v207
    %v209 = vsel %vm206, %v208, %v204
    %v210 = vmul.f32 1.0, %v209
    %v211 = vmul.f32 %v193, %v210
    %v212 = vsub.f32 %v188, %v58
    %v213 = vmul.f32 %v211, %v212
    %v214 = vadd.f32 %v58, %v213
    %215 = vst [vmem:[#allocation8] sm:$0xff] %v214
    // Predicated region
    $region26: #{tpu_custom_call.1} parent=1 // pred_check
      _
    $region27: #{tpu_custom_call.1} parent=1 // pred_check_branch
      %217 = sbr.rel (0) target = $region29
    $region28: #{tpu_custom_call.1} parent=1 // pred_region
      %219 = vsyncadd [#allocation4], 0
      %s221 = sshll.u32 [#allocation8], 4
      %s222 = int_to_ptr.vmem [resolvable:$true] %s221
      %s223 = sshll.u32 %s3, 4
      %s224 = int_to_ptr.hbm [resolvable:$true] %s223
      %226 = dma.vmem_to_hbm [thread:$0]  %s222, 128, %s224, [#allocation4]
    $region29: #{tpu_custom_call.1} parent=1 // pred_fallthru
      _
    // Predicated region
    $region30: #{tpu_custom_call.1} parent=1 // pred_check
      _
    $region31: #{tpu_custom_call.1} parent=1 // pred_check_branch
      %228 = sbr.rel (0) target = $region33
    $region32: #{tpu_custom_call.1} parent=1 // pred_region
      %230 = dma.done [#allocation4], 128
    $region33: #{tpu_custom_call.1} parent=1 // pred_fallthru
      _
    %231 = vsyncpa [#allocation3], 1
    %232 = vsyncpa [#allocation6], 1
    %233 = vsyncpa [#allocation4], 1

</llo_original>
